<compile_context>
chip_gen: v7x
topology: tpu7x:2x2x1
jax: 0.10.0
libtpu: 0.0.40
codegen_flags: <defaults>
</compile_context>

<pallas_src>
import jax
import jax.numpy as jnp
from jax.experimental import pallas as pl
from jax.experimental.pallas import tpu as pltpu


# ----------------------------- Pallas kernels -----------------------------

def _matmul_bias_relu_kernel(p_ref, w_ref, b_ref, o_ref, acc_ref):
    """out = relu(patches @ W_scaled + shift)   — conv + folded BN + relu.

    w_ref holds the whole scaled weight, reshaped (nk, tk, C); the current
    K slab is w_ref[k].  The downsample-shortcut path reuses this kernel with
    the shortcut columns concatenated into patches/weights and its shift
    folded into b_ref.
    """
    k = pl.program_id(1)
    prod = jnp.dot(p_ref[...], w_ref[k], preferred_element_type=jnp.float32)

    @pl.when(k == 0)
    def _():
        acc_ref[...] = prod            # first step: write, no zero-fill + add

    @pl.when(k != 0)
    def _():
        acc_ref[...] += prod

    @pl.when(k == pl.num_programs(1) - 1)
    def _():
        o_ref[...] = jnp.maximum(acc_ref[...] + b_ref[...], 0.0).astype(o_ref.dtype)


def _matmul_bias_add_relu_kernel(p_ref, w_ref, b_ref, r_ref, o_ref, acc_ref):
    """out = relu(patches @ W_scaled + shift + residual) — identity shortcut."""
    k = pl.program_id(1)
    prod = jnp.dot(p_ref[...], w_ref[k], preferred_element_type=jnp.float32)

    @pl.when(k == 0)
    def _():
        acc_ref[...] = prod

    @pl.when(k != 0)
    def _():
        acc_ref[...] += prod

    @pl.when(k == pl.num_programs(1) - 1)
    def _():
        o_ref[...] = jnp.maximum(
            acc_ref[...] + b_ref[...] + r_ref[...].astype(jnp.float32),
            0.0).astype(o_ref.dtype)


# ----------------------------- tiling helpers ------------------------------

def _round_up(x, m):
    return (x + m - 1) // m * m


def _pick_vmem_limit():
    """v5e/v6e have 128 MiB physical VMEM (raise the scoped limit); keep a
    conservative 48 MiB everywhere else so it always fits v7x's 64 MiB."""
    kind = ""
    try:
        kind = jax.devices()[0].device_kind.lower()
    except Exception:
        pass
    if ("v5" in kind) or ("v6" in kind):
        return 100 * 1024 * 1024
    return 48 * 1024 * 1024


_VMEM_LIMIT = _pick_vmem_limit()


def _tile_and_pad(size, max_tile=512):
    """Return (tile, padded_size) with padded_size % tile == 0.

    Never falls back to 128-wide tiles for large dims: if no clean >=256
    divisor exists, the dimension is zero-padded up to a multiple of max_tile
    (zeros in M rows / K columns are harmless)."""
    padded = _round_up(size, 128)
    if padded <= max_tile:
        return padded, padded
    for t in (512, 384, 256):
        if t <= max_tile and padded % t == 0:
            return t, padded
    padded = _round_up(padded, max_tile)
    return max_tile, padded


def _maybe_split_m(tm, m_pad):
    """v7x has 2 TensorCores: make sure the 'parallel' M axis has >= 2 blocks."""
    if m_pad // tm == 1 and m_pad >= 256:
        return m_pad // 2          # m_pad is a multiple of 128 => tm % 8 == 0
    return tm


def _pad2d(a, rows, cols):
    r, c = a.shape
    if r == rows and c == cols:
        return a
    return jnp.pad(a, ((0, rows - r), (0, cols - c)))


# ------------------------------ kernel wrapper ------------------------------

def _fused_conv_matmul(patches, w_mat, shift, residual=None,
                       out_dtype=jnp.float32):
    """relu(patches @ w_mat + shift [+ residual]) — padded, bf16, K-tiled MXU.

      patches : (M, K)  — im2col rows (possibly with the downsample shortcut's
                          columns concatenated along K)
      w_mat   : (K, C)  — BN scale already folded into the columns
      shift   : (C,)    — folded BN shift(s)
      residual: (M, C)  — identity shortcut, or None
    """
    m, kdim = patches.shape
    c = w_mat.shape[1]
    tm, m_pad = _tile_and_pad(m)
    tk, k_pad = _tile_and_pad(kdim)
    c_pad = _round_up(c, 128)
    tm = _maybe_split_m(tm, m_pad)
    nk = k_pad // tk

    p = _pad2d(patches, m_pad, k_pad).astype(jnp.bfloat16)
    # whole scaled weight, reshaped so the kernel indexes K slabs by leading dim
    w = _pad2d(w_mat, k_pad, c_pad).astype(jnp.bfloat16).reshape(nk, tk, c_pad)
    b = _pad2d(shift.reshape(1, c), 1, c_pad)

    in_specs = [
        pl.BlockSpec((tm, tk), lambda i, k: (i, k)),
        # constant index map => weight is DMA'd once and stays resident in VMEM
        pl.BlockSpec((nk, tk, c_pad), lambda i, k: (0, 0, 0)),
        pl.BlockSpec((1, c_pad), lambda i, k: (0, 0)),
    ]
    args = [p, w, b]
    if residual is not None:
        r = _pad2d(residual, m_pad, c_pad).astype(jnp.bfloat16)
        in_specs.append(pl.BlockSpec((tm, c_pad), lambda i, k: (i, 0)))
        args.append(r)
        kernel = _matmul_bias_add_relu_kernel
    else:
        kernel = _matmul_bias_relu_kernel

    out = pl.pallas_call(
        kernel,
        out_shape=jax.ShapeDtypeStruct((m_pad, c_pad), out_dtype),
        grid=(m_pad // tm, nk),
        in_specs=in_specs,
        out_specs=pl.BlockSpec((tm, c_pad), lambda i, k: (i, 0)),
        scratch_shapes=[pltpu.VMEM((tm, c_pad), jnp.float32)],
        compiler_params=pltpu.CompilerParams(
            dimension_semantics=("parallel", "arbitrary"),
            vmem_limit_bytes=_VMEM_LIMIT),
    )(*args)
    return out[:m, :c]


# ------------------------------- JAX glue ----------------------------------

def im2col(x_nhwc, ksize, stride, pad):
    """x: (N,H,W,C) -> patches (N*Ho*Wo, ksize*ksize*C), Ho, Wo."""
    n, h, w, c = x_nhwc.shape
    xp = jnp.pad(x_nhwc, ((0, 0), (pad, pad), (pad, pad), (0, 0)))
    ho = (h + 2 * pad - ksize) // stride + 1
    wo = (w + 2 * pad - ksize) // stride + 1
    cols = []
    for kh in range(ksize):
        for kw in range(ksize):
            cols.append(xp[:, kh:kh + ho * stride:stride,
                           kw:kw + wo * stride:stride, :])
    patches = jnp.concatenate(cols, axis=-1)           # (N, Ho, Wo, k*k*C)
    return patches.reshape(n * ho * wo, ksize * ksize * c), ho, wo


def torch_conv_w_to_mat(w_oihw):
    """(Cout, Cin, kh, kw) -> (kh*kw*Cin, Cout), matching im2col column order."""
    cout = w_oihw.shape[0]
    return jnp.transpose(w_oihw, (2, 3, 1, 0)).reshape(-1, cout)


def fold_bn(gamma, beta, mean, var, eps=1e-5):
    scale = gamma / jnp.sqrt(var + eps)
    shift = beta - mean * scale
    return scale, shift


def basic_block_forward(x_nchw, params):
    """Pallas implementation of BasicBlock.forward (eval-mode BN)."""
    n, cin, h, w = x_nchw.shape
    stride = params["stride"]
    planes = params["planes"]
    x = jnp.transpose(x_nchw, (0, 2, 3, 1))            # NHWC

    # ---- conv1 (3x3, stride, pad 1) + bn1 + relu ---------------------------
    p1, ho, wo = im2col(x, 3, stride, 1)
    s1, b1 = fold_bn(*params["bn1"])
    w1 = torch_conv_w_to_mat(params["w1"]) * s1[None, :]
    # bf16 intermediate: halves writeback; conv2 uses bf16 operands anyway.
    out1 = _fused_conv_matmul(p1, w1, b1, out_dtype=jnp.bfloat16)
    out1 = out1.reshape(n, ho, wo, planes)

    # ---- conv2 (3x3, stride 1, pad 1) + bn2 fused with the shortcut + relu --
    p2, _, _ = im2col(out1, 3, 1, 1)
    s2, b2 = fold_bn(*params["bn2"])
    w2 = torch_conv_w_to_mat(params["w2"]) * s2[None, :]

    if stride != 1 or cin != planes:
        # Downsample shortcut: 1x1 strided conv (padding=0 in BasicBlock, so
        # the strided NHWC view IS its im2col) + BN — fused into the same K
        # reduction: concat patch columns, stack scaled weights, fold shifts.
        sc_p = x[:, ::stride, ::stride, :].reshape(n * ho * wo, cin)
        ssc, bsc = fold_bn(*params["bnsc"])
        sc_w = torch_conv_w_to_mat(params["wsc"]) * ssc[None, :]
        p_cat = jnp.concatenate([p2, sc_p.astype(p2.dtype)], axis=1)
        w_cat = jnp.concatenate([w2, sc_w], axis=0)
        out = _fused_conv_matmul(p_cat, w_cat, b2 + bsc)
    else:
        # identity shortcut: plain fused VPU add of the (bf16) residual
        residual = x.reshape(n * ho * wo, cin)
        out = _fused_conv_matmul(p2, w2, b2, residual=residual)

    out = out.reshape(n, ho, wo, planes)
    return jnp.transpose(out, (0, 3, 1, 2))             # back to NCHW


# --------------------------- pure-JAX reference -----------------------------

def _conv_ref(x, w, stride, pad):
    return jax.lax.conv_general_dilated(
        x, w, (stride, stride), [(pad, pad), (pad, pad)],
        dimension_numbers=("NCHW", "OIHW", "NCHW"),
        precision=jax.lax.Precision.HIGHEST)


def _bn_ref(x, gamma, beta, mean, var, eps=1e-5):
    def b(v):
        return v[None, :, None, None]
    return (x - b(mean)) / jnp.sqrt(b(var) + eps) * b(gamma) + b(beta)


def basic_block_ref(x, params):
    stride = params["stride"]
    cin = x.shape[1]
    planes = params["planes"]
    out = jax.nn.relu(_bn_ref(_conv_ref(x, params["w1"], stride, 1), *params["bn1"]))
    out = _bn_ref(_conv_ref(out, params["w2"], 1, 1), *params["bn2"])
    if stride != 1 or cin != planes:
        sc = _bn_ref(_conv_ref(x, params["wsc"], stride, 0), *params["bnsc"])
    else:
        sc = x
    return jax.nn.relu(out + sc)


# --------------------------------- main -------------------------------------

if __name__ == "__main__":
    key = jax.random.PRNGKey(0)
    ks = jax.random.split(key, 20)

    def bn_params(k, planes):
        k1, k2, k3, k4 = jax.random.split(k, 4)
        gamma = jax.random.uniform(k1, (planes,), jnp.float32, 0.5, 1.5)
        beta = 0.1 * jax.random.normal(k2, (planes,), jnp.float32)
        mean = 0.1 * jax.random.normal(k3, (planes,), jnp.float32)
        var = jax.random.uniform(k4, (planes,), jnp.float32, 0.5, 1.5)
        return (gamma, beta, mean, var)

    # Tolerance reflects bf16 matmul operands, bf16 conv1 intermediate and a
    # bf16 residual (f32 MXU accumulation) vs. an f32 HIGHEST-precision ref.
    ATOL = RTOL = 3e-2

    # --- case 1: downsample path (stride=2, channel change, fused 1x1 conv) --
    N, IN_PLANES, H, W = 2, 4, 16, 16
    PLANES, STRIDE = 8, 2
    x = jax.random.normal(ks[0], (N, IN_PLANES, H, W), jnp.float32)
    params = {
        "stride": STRIDE,
        "planes": PLANES,
        "w1": 0.1 * jax.random.normal(ks[1], (PLANES, IN_PLANES, 3, 3), jnp.float32),
        "w2": 0.1 * jax.random.normal(ks[2], (PLANES, PLANES, 3, 3), jnp.float32),
        "wsc": 0.1 * jax.random.normal(ks[3], (PLANES, IN_PLANES, 1, 1), jnp.float32),
        "bn1": bn_params(ks[4], PLANES),
        "bn2": bn_params(ks[5], PLANES),
        "bnsc": bn_params(ks[6], PLANES),
    }
    out = jax.block_until_ready(basic_block_forward(x, params))
    ref = jax.block_until_ready(basic_block_ref(x, params))
    assert out.shape == ref.shape == (N, PLANES, H // STRIDE, W // STRIDE), out.shape
    assert jnp.allclose(out, ref, atol=ATOL, rtol=RTOL), \
        float(jnp.max(jnp.abs(out - ref)))

    # --- case 2: identity path (stride=1, same channels, fused VPU add) ------
    N2, C2, H2, W2 = 2, 8, 8, 8
    x2 = jax.random.normal(ks[10], (N2, C2, H2, W2), jnp.float32)
    params2 = {
        "stride": 1,
        "planes": C2,
        "w1": 0.1 * jax.random.normal(ks[11], (C2, C2, 3, 3), jnp.float32),
        "w2": 0.1 * jax.random.normal(ks[12], (C2, C2, 3, 3), jnp.float32),
        "bn1": bn_params(ks[13], C2),
        "bn2": bn_params(ks[14], C2),
    }
    out2 = jax.block_until_ready(basic_block_forward(x2, params2))
    ref2 = jax.block_until_ready(basic_block_ref(x2, params2))
    assert out2.shape == ref2.shape == (N2, C2, H2, W2), out2.shape
    assert jnp.allclose(out2, ref2, atol=ATOL, rtol=RTOL), \
        float(jnp.max(jnp.abs(out2 - ref2)))

    print("KERNEL_OK")
</pallas_src>

<mosaic_0001>
module attributes {stable_mosaic.version = 11 : i64} {
  func.func @_matmul_bias_relu_kernel(%arg0: i32, %arg1: i32, %arg2: memref<128x128xbf16, #tpu.memory_space<vmem>>, %arg3: memref<1x128x128xbf16, #tpu.memory_space<vmem>>, %arg4: memref<1x128xf32, #tpu.memory_space<vmem>>, %arg5: memref<128x128xbf16, #tpu.memory_space<vmem>>, %arg6: memref<128x128xf32, #tpu.memory_space<vmem>>) attributes {dimension_semantics = [#tpu.dimension_semantics<parallel>, #tpu.dimension_semantics<arbitrary>], iteration_bounds = array<i64: 1, 1>, scalar_prefetch = 0 : i64, scratch_operands = 1 : i64, tpu.core_type = #tpu.core_type<tc>, window_params = [{transform_indices = @transform_0, window_bounds = array<i64: 128, 128>}, {pipeline_mode = #tpu.pipeline_mode<synchronous>, transform_indices = @transform_1, window_bounds = array<i64: 1, 128, 128>}, {pipeline_mode = #tpu.pipeline_mode<synchronous>, transform_indices = @transform_2, window_bounds = array<i64: 1, 128>}, {transform_indices = @transform_3, window_bounds = array<i64: 128, 128>}]} {
    %c0 = arith.constant 0 : index
    %c0_0 = arith.constant 0 : index
    %0 = vector.load %arg2[%c0, %c0_0] : memref<128x128xbf16, #tpu.memory_space<vmem>>, vector<128x128xbf16>
    %1 = arith.index_cast %arg1 : i32 to index
    %c0_1 = arith.constant 0 : index
    %c0_2 = arith.constant 0 : index
    %2 = vector.load %arg3[%1, %c0_1, %c0_2] : memref<1x128x128xbf16, #tpu.memory_space<vmem>>, vector<1x128x128xbf16>
    %3 = vector.shape_cast %2 : vector<1x128x128xbf16> to vector<128x128xbf16>
    %cst = arith.constant dense<0.000000e+00> : vector<128x128xf32>
    %4 = tpu.matmul %0, %3, %cst {dimension_numbers = #tpu.dot_dimension_numbers<[1], [0], [0], [1], [0, 0, 1, 1], [], []>} : vector<128x128xbf16>, vector<128x128xbf16>, vector<128x128xf32> -> vector<128x128xf32>
    %c0_i32 = arith.constant 0 : i32
    %5 = arith.cmpi eq, %arg1, %c0_i32 : i32
    %6 = arith.extui %5 : i1 to i32
    %c0_i32_3 = arith.constant 0 : i32
    %7 = arith.cmpi ne, %6, %c0_i32_3 : i32
    scf.if %7 {
      %c0_8 = arith.constant 0 : index
      %c0_9 = arith.constant 0 : index
      %14 = vector.load %arg6[%c0_8, %c0_9] : memref<128x128xf32, #tpu.memory_space<vmem>>, vector<128x128xf32>
      tpu.vector_store %arg6[%c0_8, %c0_9], %4 {strides = array<i32>} : memref<128x128xf32, #tpu.memory_space<vmem>>, vector<128x128xf32>,
    } else {
    }
    %c0_i32_4 = arith.constant 0 : i32
    %8 = arith.cmpi ne, %arg1, %c0_i32_4 : i32
    %9 = arith.extui %8 : i1 to i32
    %c0_i32_5 = arith.constant 0 : i32
    %10 = arith.cmpi ne, %9, %c0_i32_5 : i32
    scf.if %10 {
      %c0_8 = arith.constant 0 : index
      %c0_9 = arith.constant 0 : index
      %14 = vector.load %arg6[%c0_8, %c0_9] : memref<128x128xf32, #tpu.memory_space<vmem>>, vector<128x128xf32>
      %15 = arith.addf %14, %4 : vector<128x128xf32>
      %c0_10 = arith.constant 0 : index
      %c0_11 = arith.constant 0 : index
      %16 = vector.load %arg6[%c0_10, %c0_11] : memref<128x128xf32, #tpu.memory_space<vmem>>, vector<128x128xf32>
      tpu.vector_store %arg6[%c0_10, %c0_11], %15 {strides = array<i32>} : memref<128x128xf32, #tpu.memory_space<vmem>>, vector<128x128xf32>,
    } else {
    }
    %c0_i32_6 = arith.constant 0 : i32
    %11 = arith.cmpi eq, %arg1, %c0_i32_6 : i32
    %12 = arith.extui %11 : i1 to i32
    %c0_i32_7 = arith.constant 0 : i32
    %13 = arith.cmpi ne, %12, %c0_i32_7 : i32
    scf.if %13 {
      %c0_8 = arith.constant 0 : index
      %c0_9 = arith.constant 0 : index
      %14 = vector.load %arg6[%c0_8, %c0_9] : memref<128x128xf32, #tpu.memory_space<vmem>>, vector<128x128xf32>
      %c0_10 = arith.constant 0 : index
      %c0_11 = arith.constant 0 : index
      %15 = vector.load %arg4[%c0_10, %c0_11] : memref<1x128xf32, #tpu.memory_space<vmem>>, vector<1x128xf32>
      %16 = vector.broadcast %15 : vector<1x128xf32> to vector<128x128xf32>
      %17 = arith.addf %14, %16 : vector<128x128xf32>
      %cst_12 = arith.constant 0.000000e+00 : f32
      %18 = vector.broadcast %cst_12 : f32 to vector<128x128xf32>
      %19 = arith.maximumf %17, %18 : vector<128x128xf32>
      %20 = arith.truncf %19 : vector<128x128xf32> to vector<128x128xbf16>
      %c0_13 = arith.constant 0 : index
      %c0_14 = arith.constant 0 : index
      %21 = vector.load %arg5[%c0_13, %c0_14] : memref<128x128xbf16, #tpu.memory_space<vmem>>, vector<128x128xbf16>
      tpu.vector_store %arg5[%c0_13, %c0_14], %20 {strides = array<i32>} : memref<128x128xbf16, #tpu.memory_space<vmem>>, vector<128x128xbf16>,
    } else {
    }
    return
  }
  func.func @transform_0(%arg0: i32, %arg1: i32) -> (i32, i32) {
    %c0_i32 = arith.constant 0 : i32
    return %arg0, %arg1 : i32, i32
  }
  func.func @transform_1(%arg0: i32, %arg1: i32) -> (i32, i32, i32) {
    %c0_i32 = arith.constant 0 : i32
    %c0_i32_0 = arith.constant 0 : i32
    %c0_i32_1 = arith.constant 0 : i32
    %c0_i32_2 = arith.constant 0 : i32
    return %c0_i32, %c0_i32_0, %c0_i32_1 : i32, i32, i32
  }
  func.func @transform_2(%arg0: i32, %arg1: i32) -> (i32, i32) {
    %c0_i32 = arith.constant 0 : i32
    %c0_i32_0 = arith.constant 0 : i32
    %c0_i32_1 = arith.constant 0 : i32
    return %c0_i32, %c0_i32_0 : i32, i32
  }
  func.func @transform_3(%arg0: i32, %arg1: i32) -> (i32, i32) {
    %c0_i32 = arith.constant 0 : i32
    %c0_i32_0 = arith.constant 0 : i32
    return %arg0, %c0_i32 : i32, i32
  }
}

</mosaic_0001>

<llo_original>
// kernel: tpu_custom_call.1
$region0: #{tpu_custom_call.1}
  #allocation0 [shape = 'u32[]', space=smem, size = 0x4, offset = 0x4, fixed_abs, tag = 'smem constant byte address 0x4 - core index']
  #allocation1 [shape = 'u32[144,128]{1,0:T(1,128)}', space=vmem, size = 0x12000, scoped, tag = 'internal scratch']
  #allocation2 [shape = 'f32[128,128]{1,0:T(8,128)}', space=vmem, size = 0x10000, scoped, tag = 'scratch operand']
  %s0 = inlined_call_operand.hbm [shape: bf16[128,128], index: 0, kind: input, shape index: {}]
  %s1 = inlined_call_operand.hbm [shape: bf16[1,128,128], index: 1, kind: input, shape index: {}]
  %s2 = inlined_call_operand.vmem [shape: f32[1,128], index: 2, kind: input, shape index: {}]
  %s3 = inlined_call_operand.hbm [shape: bf16[128,128], index: 3, kind: output, shape index: {}]
  %s4 = sld [smem:[#allocation0]]
  $region42: #{tpu_custom_call.1} parent=0
    _
  %s6 = ssub.s32 1, %s4
  %s7 = scalar_select 0, %s6, %s4
  $region1: #{tpu_custom_call.1} parent=0
    #allocation3 [shape = 'u8[32768]{0}', space=vmem, size = 0x8000, scoped, tag = 'input window, operand 0, single buffered']
    #allocation4 [shape = 's32[1]{0}', space=sflag, size = 0x4, scoped, tag = 'scoped memory for tpu_custom_call.1']
    #allocation5 [shape = 's32[1]{0}', space=sflag, size = 0x4, scoped, tag = 'scoped memory for tpu_custom_call.1']
    #allocation6 [shape = 'u8[32768]{0}', space=vmem, size = 0x8000, scoped, tag = 'input window, operand 1, single buffered']
    #allocation7 [shape = 's32[1]{0}', space=sflag, size = 0x4, scoped, tag = 'scoped memory for tpu_custom_call.1']
    #allocation8 [shape = 'u8[32768]{0}', space=vmem, size = 0x8000, scoped, tag = 'output window, operand 0, single buffered']
    %8 = vsyncpa [#allocation4], 0
    %9 = vsyncpa [#allocation7], 0
    %10 = vsyncpa [#allocation5], 0
    // Predicated region
    $region2: #{tpu_custom_call.1} parent=1 // pred_check
      _
    $region3: #{tpu_custom_call.1} parent=1 // pred_check_branch
      %12 = sbr.rel (0) target = $region5
    $region4: #{tpu_custom_call.1} parent=1 // pred_region
      %s14 = ssub.s32 1024, 1024
      %15 = vsyncadd [#allocation4], %s14
      %s16 = sshll.u32 [#allocation3], 4
      %s17 = int_to_ptr.vmem [resolvable:$true] %s16
      %22 = dma.hbm_to_vmem [thread:$0]  %s0, 1024, %s17, [#allocation4], 64, 64, 4
    $region5: #{tpu_custom_call.1} parent=1 // pred_fallthru
      _
    // Predicated region
    $region6: #{tpu_custom_call.1} parent=1 // pred_check
      _
    $region7: #{tpu_custom_call.1} parent=1 // pred_check_branch
      %24 = sbr.rel (0) target = $region9
    $region8: #{tpu_custom_call.1} parent=1 // pred_region
      %s26 = ssub.s32 1024, 1024
      %27 = vsyncadd [#allocation7], %s26
      %s28 = sshll.u32 [#allocation6], 4
      %s29 = int_to_ptr.vmem [resolvable:$true] %s28
      %34 = dma.hbm_to_vmem [thread:$0]  %s1, 1024, %s29, [#allocation7], 64, 64, 4
    $region9: #{tpu_custom_call.1} parent=1 // pred_fallthru
      _
    // Predicated region
    $region10: #{tpu_custom_call.1} parent=1 // pred_check
      _
    $region11: #{tpu_custom_call.1} parent=1 // pred_check_branch
      %36 = sbr.rel (0) target = $region13
    $region12: #{tpu_custom_call.1} parent=1 // pred_region
      _
    $region13: #{tpu_custom_call.1} parent=1 // pred_fallthru
      _
    // Predicated region
    $region14: #{tpu_custom_call.1} parent=1 // pred_check
      _
    $region15: #{tpu_custom_call.1} parent=1 // pred_check_branch
      %38 = sbr.rel (0) target = $region17
    $region16: #{tpu_custom_call.1} parent=1 // pred_region
      %39 = dma.done [#allocation4], 1024
    $region17: #{tpu_custom_call.1} parent=1 // pred_fallthru
      _
    // Predicated region
    $region18: #{tpu_custom_call.1} parent=1 // pred_check
      _
    $region19: #{tpu_custom_call.1} parent=1 // pred_check_branch
      %41 = sbr.rel (0) target = $region21
    $region20: #{tpu_custom_call.1} parent=1 // pred_region
      %42 = dma.done [#allocation7], 1024
    $region21: #{tpu_custom_call.1} parent=1 // pred_fallthru
      _
    %v44 = vld [vmem:[#allocation3] sm:$0xf]
    %v45 = vld [vmem:[#allocation3 + $0x4] sm:$0xf]
    %v46 = vld [vmem:[#allocation3 + $0x8] sm:$0xf]
    %v47 = vld [vmem:[#allocation3 + $0xc] sm:$0xf]
    %v48 = vld [vmem:[#allocation3 + $0x10] sm:$0xf]
    %v49 = vld [vmem:[#allocation3 + $0x14] sm:$0xf]
    %v50 = vld [vmem:[#allocation3 + $0x18] sm:$0xf]
    %v51 = vld [vmem:[#allocation3 + $0x1c] sm:$0xf]
    %v52 = vld [vmem:[#allocation3 + $0x20] sm:$0xf]
    %v53 = vld [vmem:[#allocation3 + $0x24] sm:$0xf]
    %v54 = vld [vmem:[#allocation3 + $0x28] sm:$0xf]
    %v55 = vld [vmem:[#allocation3 + $0x2c] sm:$0xf]
    %v56 = vld [vmem:[#allocation3 + $0x30] sm:$0xf]
    %v57 = vld [vmem:[#allocation3 + $0x34] sm:$0xf]
    %v58 = vld [vmem:[#allocation3 + $0x38] sm:$0xf]
    %v59 = vld [vmem:[#allocation3 + $0x3c] sm:$0xf]
    %s60 = smul.u32 0, 16
    %s61 = smul.addr %s60, 4
    %s62 = scalar_lea.vmem [#allocation6], %s61
    %v63 = vld [vmem:[%s62] sm:$0xf]
    %v64 = vld [vmem:[%s62 + $0x4] sm:$0xf]
    %v65 = vld [vmem:[%s62 + $0x8] sm:$0xf]
    %v66 = vld [vmem:[%s62 + $0xc] sm:$0xf]
    %v67 = vld [vmem:[%s62 + $0x10] sm:$0xf]
    %v68 = vld [vmem:[%s62 + $0x14] sm:$0xf]
    %v69 = vld [vmem:[%s62 + $0x18] sm:$0xf]
    %v70 = vld [vmem:[%s62 + $0x1c] sm:$0xf]
    %v71 = vld [vmem:[%s62 + $0x20] sm:$0xf]
    %v72 = vld [vmem:[%s62 + $0x24] sm:$0xf]
    %v73 = vld [vmem:[%s62 + $0x28] sm:$0xf]
    %v74 = vld [vmem:[%s62 + $0x2c] sm:$0xf]
    %v75 = vld [vmem:[%s62 + $0x30] sm:$0xf]
    %v76 = vld [vmem:[%s62 + $0x34] sm:$0xf]
    %v77 = vld [vmem:[%s62 + $0x38] sm:$0xf]
    %v78 = vld [vmem:[%s62 + $0x3c] sm:$0xf]
    %v95 = vunpack.c.l.b16 %v44
    %v96 = vunpack.c.l.b16 %v45
    %v97 = vunpack.c.l.b16 %v46
    %v98 = vunpack.c.l.b16 %v47
    %v99 = vunpack.c.l.b16 %v48
    %v100 = vunpack.c.l.b16 %v49
    %v101 = vunpack.c.l.b16 %v50
    %v102 = vunpack.c.l.b16 %v51
    %v103 = vunpack.c.l.b16 %v52
    %v104 = vunpack.c.l.b16 %v53
    %v105 = vunpack.c.l.b16 %v54
    %v106 = vunpack.c.l.b16 %v55
    %v107 = vunpack.c.l.b16 %v56
    %v108 = vunpack.c.l.b16 %v57
    %v109 = vunpack.c.l.b16 %v58
    %v110 = vunpack.c.l.b16 %v59
    %v111 = vpack.c.b16 %v96, %v95
    %v112 = vpack.c.b16 %v98, %v97
    %v113 = vpack.c.b16 %v100, %v99
    %v114 = vpack.c.b16 %v102, %v101
    %v115 = vpack.c.b16 %v104, %v103
    %v116 = vpack.c.b16 %v106, %v105
    %v117 = vpack.c.b16 %v108, %v107
    %v118 = vpack.c.b16 %v110, %v109
    %v143 = vunpack.c.l.b16 %v63
    %v144 = vunpack.c.l.b16 %v64
    %v145 = vunpack.c.l.b16 %v65
    %v146 = vunpack.c.l.b16 %v66
    %v147 = vunpack.c.l.b16 %v67
    %v148 = vunpack.c.l.b16 %v68
    %v149 = vunpack.c.l.b16 %v69
    %v150 = vunpack.c.l.b16 %v70
    %v151 = vunpack.c.l.b16 %v71
    %v152 = vunpack.c.l.b16 %v72
    %v153 = vunpack.c.l.b16 %v73
    %v154 = vunpack.c.l.b16 %v74
    %v155 = vunpack.c.l.b16 %v75
    %v156 = vunpack.c.l.b16 %v76
    %v157 = vunpack.c.l.b16 %v77
    %v158 = vunpack.c.l.b16 %v78
    %v159 = vpack.c.b16 %v144, %v143
    %v160 = vpack.c.b16 %v146, %v145
    %v161 = vpack.c.b16 %v148, %v147
    %v162 = vpack.c.b16 %v150, %v149
    %v163 = vpack.c.b16 %v152, %v151
    %v164 = vpack.c.b16 %v154, %v153
    %v165 = vpack.c.b16 %v156, %v155
    %v166 = vpack.c.b16 %v158, %v157
    %175 = vmatprep.subr.bf16.mxu0 0
    %176 = vmatpush1.bf16.msra.mxu0 %v159
    %177 = vmatprep.subr.bf16.mxu0 0
    %178 = vmatpush1.bf16.msra.mxu0 %v160
    %179 = vmatprep.subr.bf16.mxu0 0
    %180 = vmatpush1.bf16.msra.mxu0 %v161
    %181 = vmatprep.subr.bf16.mxu0 0
    %182 = vmatpush1.bf16.msra.mxu0 %v162
    %183 = vmatprep.subr.bf16.mxu0 0
    %184 = vmatpush1.bf16.msra.mxu0 %v163
    %185 = vmatprep.subr.bf16.mxu0 0
    %186 = vmatpush1.bf16.msra.mxu0 %v164
    %187 = vmatprep.subr.bf16.mxu0 0
    %188 = vmatpush1.bf16.msra.mxu0 %v165
    %189 = vmatprep.subr.bf16.mxu0 0
    %190 = vmatpush1.bf16.msra.mxu0 %v166
    %191 = vmatprep.subr.bf16.mxu0 0
    %192 = vmatpush1.bf16.msra.mxu0 0
    %193 = vmatprep.subr.bf16.mxu0 0
    %194 = vmatpush1.bf16.msra.mxu0 0
    %195 = vmatprep.subr.bf16.mxu0 0
    %196 = vmatpush1.bf16.msra.mxu0 0
    %197 = vmatprep.subr.bf16.mxu0 0
    %198 = vmatpush1.bf16.msra.mxu0 0
    %199 = vmatprep.subr.bf16.mxu0 0
    %200 = vmatpush1.bf16.msra.mxu0 0
    %201 = vmatprep.subr.bf16.mxu0 0
    %202 = vmatpush1.bf16.msra.mxu0 0
    %203 = vmatprep.subr.bf16.mxu0 0
    %204 = vmatpush1.bf16.msra.mxu0 0
    %205 = vmatprep.subr.bf16.mxu0 0
    %206 = vmatpush1.bf16.msra.mxu0 0
    %207 = vmatprep.mubr.bf16.mxu0 0
    %208 = vmatmul.mubr.bf16.gmra.mrb[0].mxu0 %v111
    %v209 = vpop.f32.mrb[0].mxu0
    %v210 = vadd.f32 0.0, %v209
    %v211 = vpop.f32.mrb[0].mxu0
    %v212 = vpop.f32.mrb[0].mxu0
    %v213 = vadd.f32 0.0, %v212
    %v214 = vpop.f32.mrb[0].mxu0
    %215 = vmatprep.mubr.bf16.mxu0 0
    %216 = vmatmul.mubr.bf16.gmra.mrb[0].mxu0 %v112
    %v217 = vpop.f32.mrb[0].mxu0
    %v218 = vadd.f32 0.0, %v217
    %v219 = vpop.f32.mrb[0].mxu0
    %v220 = vpop.f32.mrb[0].mxu0
    %v221 = vadd.f32 0.0, %v220
    %v222 = vpop.f32.mrb[0].mxu0
    %223 = vmatprep.mubr.bf16.mxu0 0
    %224 = vmatmul.mubr.bf16.gmra.mrb[0].mxu0 %v113
    %v225 = vpop.f32.mrb[0].mxu0
    %v226 = vadd.f32 0.0, %v225
    %v227 = vpop.f32.mrb[0].mxu0
    %v228 = vpop.f32.mrb[0].mxu0
    %v229 = vadd.f32 0.0, %v228
    %v230 = vpop.f32.mrb[0].mxu0
    %231 = vmatprep.mubr.bf16.mxu0 0
    %232 = vmatmul.mubr.bf16.gmra.mrb[0].mxu0 %v114
    %v233 = vpop.f32.mrb[0].mxu0
    %v234 = vadd.f32 0.0, %v233
    %v235 = vpop.f32.mrb[0].mxu0
    %v236 = vpop.f32.mrb[0].mxu0
    %v237 = vadd.f32 0.0, %v236
    %v238 = vpop.f32.mrb[0].mxu0
    %239 = vmatprep.mubr.bf16.mxu0 0
    %240 = vmatmul.mubr.bf16.gmra.mrb[0].mxu0 %v115
    %v241 = vpop.f32.mrb[0].mxu0
    %v242 = vadd.f32 0.0, %v241
    %v243 = vpop.f32.mrb[0].mxu0
    %v244 = vpop.f32.mrb[0].mxu0
    %v245 = vadd.f32 0.0, %v244
    %v246 = vpop.f32.mrb[0].mxu0
    %247 = vmatprep.mubr.bf16.mxu0 0
    %248 = vmatmul.mubr.bf16.gmra.mrb[0].mxu0 %v116
    %v249 = vpop.f32.mrb[0].mxu0
    %v250 = vadd.f32 0.0, %v249
    %v251 = vpop.f32.mrb[0].mxu0
    %v252 = vpop.f32.mrb[0].mxu0
    %v253 = vadd.f32 0.0, %v252
    %v254 = vpop.f32.mrb[0].mxu0
    %255 = vmatprep.mubr.bf16.mxu0 0
    %256 = vmatmul.mubr.bf16.gmra.mrb[0].mxu0 %v117
    %v257 = vpop.f32.mrb[0].mxu0
    %v258 = vadd.f32 0.0, %v257
    %v259 = vpop.f32.mrb[0].mxu0
    %v260 = vpop.f32.mrb[0].mxu0
    %v261 = vadd.f32 0.0, %v260
    %v262 = vpop.f32.mrb[0].mxu0
    %263 = vmatprep.mubr.bf16.mxu0 0
    %264 = vmatmul.mubr.bf16.gmra.mrb[0].mxu0 %v118
    %v265 = vpop.f32.mrb[0].mxu0
    %v266 = vadd.f32 0.0, %v265
    %v267 = vpop.f32.mrb[0].mxu0
    %v268 = vpop.f32.mrb[0].mxu0
    %v269 = vadd.f32 0.0, %v268
    %v270 = vpop.f32.mrb[0].mxu0
    %271 = vdwg.mxu0
    %p272 = scmp.eq.s32.totalorder 0, 0
    // Predicated region
    $region22: #{tpu_custom_call.1} parent=1 // pred_check
      %p273 = pneg %p272
    $region23: #{tpu_custom_call.1} parent=1 // pred_check_branch
      %275 = sbr.rel (%p273) target = $region25
    $region24: #{tpu_custom_call.1} parent=1 // pred_region
      %276 = vst [vmem:[#allocation2] sm:$0xff] %v210
      %277 = vst [vmem:[#allocation2 + $0x8] sm:$0xff] %v213
      %278 = vst [vmem:[#allocation2 + $0x10] sm:$0xff] %v218
      %279 = vst [vmem:[#allocation2 + $0x18] sm:$0xff] %v221
      %280 = vst [vmem:[#allocation2 + $0x20] sm:$0xff] %v226
      %281 = vst [vmem:[#allocation2 + $0x28] sm:$0xff] %v229
      %282 = vst [vmem:[#allocation2 + $0x30] sm:$0xff] %v234
      %283 = vst [vmem:[#allocation2 + $0x38] sm:$0xff] %v237
      %284 = vst [vmem:[#allocation2 + $0x40] sm:$0xff] %v242
      %285 = vst [vmem:[#allocation2 + $0x48] sm:$0xff] %v245
      %286 = vst [vmem:[#allocation2 + $0x50] sm:$0xff] %v250
      %287 = vst [vmem:[#allocation2 + $0x58] sm:$0xff] %v253
      %288 = vst [vmem:[#allocation2 + $0x60] sm:$0xff] %v258
      %289 = vst [vmem:[#allocation2 + $0x68] sm:$0xff] %v261
      %290 = vst [vmem:[#allocation2 + $0x70] sm:$0xff] %v266
      %291 = vst [vmem:[#allocation2 + $0x78] sm:$0xff] %v269
    $region25: #{tpu_custom_call.1} parent=1 // pred_fallthru
      _
    %p292 = scmp.ne.s32.totalorder 0, 0
    // Predicated region
    $region26: #{tpu_custom_call.1} parent=1 // pred_check
      %p293 = pneg %p292
    $region27: #{tpu_custom_call.1} parent=1 // pred_check_branch
      %295 = sbr.rel (%p293) target = $region29
    $region28: #{tpu_custom_call.1} parent=1 // pred_region
      %v296 = vld [vmem:[#allocation2] sm:$0xff]
      %v297 = vld [vmem:[#allocation2 + $0x8] sm:$0xff]
      %v298 = vld [vmem:[#allocation2 + $0x10] sm:$0xff]
      %v299 = vld [vmem:[#allocation2 + $0x18] sm:$0xff]
      %v300 = vld [vmem:[#allocation2 + $0x20] sm:$0xff]
      %v301 = vld [vmem:[#allocation2 + $0x28] sm:$0xff]
      %v302 = vld [vmem:[#allocation2 + $0x30] sm:$0xff]
      %v303 = vld [vmem:[#allocation2 + $0x38] sm:$0xff]
      %v304 = vld [vmem:[#allocation2 + $0x40] sm:$0xff]
      %v305 = vld [vmem:[#allocation2 + $0x48] sm:$0xff]
      %v306 = vld [vmem:[#allocation2 + $0x50] sm:$0xff]
      %v307 = vld [vmem:[#allocation2 + $0x58] sm:$0xff]
      %v308 = vld [vmem:[#allocation2 + $0x60] sm:$0xff]
      %v309 = vld [vmem:[#allocation2 + $0x68] sm:$0xff]
      %v310 = vld [vmem:[#allocation2 + $0x70] sm:$0xff]
      %v311 = vld [vmem:[#allocation2 + $0x78] sm:$0xff]
      %v312 = vadd.f32 %v296, %v210
      %v313 = vadd.f32 %v297, %v213
      %v314 = vadd.f32 %v298, %v218
      %v315 = vadd.f32 %v299, %v221
      %v316 = vadd.f32 %v300, %v226
      %v317 = vadd.f32 %v301, %v229
      %v318 = vadd.f32 %v302, %v234
      %v319 = vadd.f32 %v303, %v237
      %v320 = vadd.f32 %v304, %v242
      %v321 = vadd.f32 %v305, %v245
      %v322 = vadd.f32 %v306, %v250
      %v323 = vadd.f32 %v307, %v253
      %v324 = vadd.f32 %v308, %v258
      %v325 = vadd.f32 %v309, %v261
      %v326 = vadd.f32 %v310, %v266
      %v327 = vadd.f32 %v311, %v269
      %328 = vst [vmem:[#allocation2] sm:$0xff] %v312
      %329 = vst [vmem:[#allocation2 + $0x8] sm:$0xff] %v313
      %330 = vst [vmem:[#allocation2 + $0x10] sm:$0xff] %v314
      %331 = vst [vmem:[#allocation2 + $0x18] sm:$0xff] %v315
      %332 = vst [vmem:[#allocation2 + $0x20] sm:$0xff] %v316
      %333 = vst [vmem:[#allocation2 + $0x28] sm:$0xff] %v317
      %334 = vst [vmem:[#allocation2 + $0x30] sm:$0xff] %v318
      %335 = vst [vmem:[#allocation2 + $0x38] sm:$0xff] %v319
      %336 = vst [vmem:[#allocation2 + $0x40] sm:$0xff] %v320
      %337 = vst [vmem:[#allocation2 + $0x48] sm:$0xff] %v321
      %338 = vst [vmem:[#allocation2 + $0x50] sm:$0xff] %v322
      %339 = vst [vmem:[#allocation2 + $0x58] sm:$0xff] %v323
      %340 = vst [vmem:[#allocation2 + $0x60] sm:$0xff] %v324
      %341 = vst [vmem:[#allocation2 + $0x68] sm:$0xff] %v325
      %342 = vst [vmem:[#allocation2 + $0x70] sm:$0xff] %v326
      %343 = vst [vmem:[#allocation2 + $0x78] sm:$0xff] %v327
    $region29: #{tpu_custom_call.1} parent=1 // pred_fallthru
      _
    // Predicated region
    $region30: #{tpu_custom_call.1} parent=1 // pred_check
      %p344 = pneg %p272
    $region31: #{tpu_custom_call.1} parent=1 // pred_check_branch
      %346 = sbr.rel (%p344) target = $region33
    $region32: #{tpu_custom_call.1} parent=1 // pred_region
      %v347 = vld [vmem:[#allocation2] sm:$0xff]
      %v348 = vld [vmem:[#allocation2 + $0x8] sm:$0xff]
      %v349 = vld [vmem:[#allocation2 + $0x10] sm:$0xff]
      %v350 = vld [vmem:[#allocation2 + $0x18] sm:$0xff]
      %v351 = vld [vmem:[#allocation2 + $0x20] sm:$0xff]
      %v352 = vld [vmem:[#allocation2 + $0x28] sm:$0xff]
      %v353 = vld [vmem:[#allocation2 + $0x30] sm:$0xff]
      %v354 = vld [vmem:[#allocation2 + $0x38] sm:$0xff]
      %v355 = vld [vmem:[#allocation2 + $0x40] sm:$0xff]
      %v356 = vld [vmem:[#allocation2 + $0x48] sm:$0xff]
      %v357 = vld [vmem:[#allocation2 + $0x50] sm:$0xff]
      %v358 = vld [vmem:[#allocation2 + $0x58] sm:$0xff]
      %v359 = vld [vmem:[#allocation2 + $0x60] sm:$0xff]
      %v360 = vld [vmem:[#allocation2 + $0x68] sm:$0xff]
      %v361 = vld [vmem:[#allocation2 + $0x70] sm:$0xff]
      %v362 = vld [vmem:[#allocation2 + $0x78] sm:$0xff]
      %v363 = vld [vmem:[%s2] sm:$0x1]
      %v365 = vlaneseq
      %v366 = vshrl.u32 %v365, 7
      %v367 = vsub.s32 0, %v366
      %v368 = vrot.slane %v363, %v367
      %v370 = vadd.f32 %v347, %v368
      %v371 = vadd.f32 %v348, %v368
      %v372 = vadd.f32 %v349, %v368
      %v373 = vadd.f32 %v350, %v368
      %v374 = vadd.f32 %v351, %v368
      %v375 = vadd.f32 %v352, %v368
      %v376 = vadd.f32 %v353, %v368
      %v377 = vadd.f32 %v354, %v368
      %v378 = vadd.f32 %v355, %v368
      %v379 = vadd.f32 %v356, %v368
      %v380 = vadd.f32 %v357, %v368
      %v381 = vadd.f32 %v358, %v368
      %v382 = vadd.f32 %v359, %v368
      %v383 = vadd.f32 %v360, %v368
      %v384 = vadd.f32 %v361, %v368
      %v385 = vadd.f32 %v362, %v368
      %v386 = vmax.f32 %v370, 0.0
      %v387 = vmax.f32 %v371, 0.0
      %v388 = vmax.f32 %v372, 0.0
      %v389 = vmax.f32 %v373, 0.0
      %v390 = vmax.f32 %v374, 0.0
      %v391 = vmax.f32 %v375, 0.0
      %v392 = vmax.f32 %v376, 0.0
      %v393 = vmax.f32 %v377, 0.0
      %v394 = vmax.f32 %v378, 0.0
      %v395 = vmax.f32 %v379, 0.0
      %v396 = vmax.f32 %v380, 0.0
      %v397 = vmax.f32 %v381, 0.0
      %v398 = vmax.f32 %v382, 0.0
      %v399 = vmax.f32 %v383, 0.0
      %v400 = vmax.f32 %v384, 0.0
      %v401 = vmax.f32 %v385, 0.0
      %v402 = vpack.c.bf16 %v387, %v386
      %v403 = vpack.c.bf16 %v389, %v388
      %v404 = vpack.c.bf16 %v391, %v390
      %v405 = vpack.c.bf16 %v393, %v392
      %v406 = vpack.c.bf16 %v395, %v394
      %v407 = vpack.c.bf16 %v397, %v396
      %v408 = vpack.c.bf16 %v399, %v398
      %v409 = vpack.c.bf16 %v401, %v400
      %v418 = vunpack.c.l.b16 %v402
      %v419 = vunpack.c.h.b16 %v402
      %v420 = vunpack.c.l.b16 %v403
      %v421 = vunpack.c.h.b16 %v403
      %v422 = vunpack.c.l.b16 %v404
      %v423 = vunpack.c.h.b16 %v404
      %v424 = vunpack.c.l.b16 %v405
      %v425 = vunpack.c.h.b16 %v405
      %v426 = vunpack.c.l.b16 %v406
      %v427 = vunpack.c.h.b16 %v406
      %v428 = vunpack.c.l.b16 %v407
      %v429 = vunpack.c.h.b16 %v407
      %v430 = vunpack.c.l.b16 %v408
      %v431 = vunpack.c.h.b16 %v408
      %v432 = vunpack.c.l.b16 %v409
      %v433 = vunpack.c.h.b16 %v409
      %v434 = vpack.c.b16 %v418, %v418
      %v435 = vpack.c.b16 %v419, %v419
      %v436 = vpack.c.b16 %v420, %v420
      %v437 = vpack.c.b16 %v421, %v421
      %v438 = vpack.c.b16 %v422, %v422
      %v439 = vpack.c.b16 %v423, %v423
      %v440 = vpack.c.b16 %v424, %v424
      %v441 = vpack.c.b16 %v425, %v425
      %v442 = vpack.c.b16 %v426, %v426
      %v443 = vpack.c.b16 %v427, %v427
      %v444 = vpack.c.b16 %v428, %v428
      %v445 = vpack.c.b16 %v429, %v429
      %v446 = vpack.c.b16 %v430, %v430
      %v447 = vpack.c.b16 %v431, %v431
      %v448 = vpack.c.b16 %v432, %v432
      %v449 = vpack.c.b16 %v433, %v433
      %466 = vst [vmem:[#allocation8] sm:$0xf] %v434
      %467 = vst [vmem:[#allocation8 + $0x4] sm:$0xf] %v435
      %468 = vst [vmem:[#allocation8 + $0x8] sm:$0xf] %v436
      %469 = vst [vmem:[#allocation8 + $0xc] sm:$0xf] %v437
      %470 = vst [vmem:[#allocation8 + $0x10] sm:$0xf] %v438
      %471 = vst [vmem:[#allocation8 + $0x14] sm:$0xf] %v439
      %472 = vst [vmem:[#allocation8 + $0x18] sm:$0xf] %v440
      %473 = vst [vmem:[#allocation8 + $0x1c] sm:$0xf] %v441
      %474 = vst [vmem:[#allocation8 + $0x20] sm:$0xf] %v442
      %475 = vst [vmem:[#allocation8 + $0x24] sm:$0xf] %v443
      %476 = vst [vmem:[#allocation8 + $0x28] sm:$0xf] %v444
      %477 = vst [vmem:[#allocation8 + $0x2c] sm:$0xf] %v445
      %478 = vst [vmem:[#allocation8 + $0x30] sm:$0xf] %v446
      %479 = vst [vmem:[#allocation8 + $0x34] sm:$0xf] %v447
      %480 = vst [vmem:[#allocation8 + $0x38] sm:$0xf] %v448
      %481 = vst [vmem:[#allocation8 + $0x3c] sm:$0xf] %v449
    $region33: #{tpu_custom_call.1} parent=1 // pred_fallthru
      _
    // Predicated region
    $region34: #{tpu_custom_call.1} parent=1 // pred_check
      _
    $region35: #{tpu_custom_call.1} parent=1 // pred_check_branch
      %483 = sbr.rel (0) target = $region37
    $region36: #{tpu_custom_call.1} parent=1 // pred_region
      %s485 = ssub.s32 1024, 1024
      %486 = vsyncadd [#allocation5], %s485
      %s487 = sshll.u32 [#allocation8], 4
      %s488 = int_to_ptr.vmem [resolvable:$true] %s487
      %493 = dma.vmem_to_hbm [thread:$0]  %s488, 1024, %s3, [#allocation5], 64, 64, 4
    $region37: #{tpu_custom_call.1} parent=1 // pred_fallthru
      _
    // Predicated region
    $region38: #{tpu_custom_call.1} parent=1 // pred_check
      _
    $region39: #{tpu_custom_call.1} parent=1 // pred_check_branch
      %495 = sbr.rel (0) target = $region41
    $region40: #{tpu_custom_call.1} parent=1 // pred_region
      %496 = dma.done [#allocation5], 1024
    $region41: #{tpu_custom_call.1} parent=1 // pred_fallthru
      _
    %497 = vsyncpa [#allocation4], 1
    %498 = vsyncpa [#allocation7], 1
    %499 = vsyncpa [#allocation5], 1

</llo_original>
